<compile_context>
chip_gen: v6e
topology: v6e:2x2x1
jax: 0.10.0
libtpu: 0.0.40
codegen_flags: <defaults>
</compile_context>

<pallas_src>
import jax
import jax.numpy as jnp
from jax.experimental import pallas as pl
from jax.experimental.pallas import tpu as pltpu

LANE = 128               # vreg lane width

NUM_FILTRATIONS = 10
HIDDEN_DIM = 32          # module default; MLP hidden is hidden_dim // 2 = 16
OUTPUT_DIM = 16


def _round_up(x, m):
    return ((x + m - 1) // m) * m


# ---------------------------------------------------------------------------
# Pallas kernel: fused  o = (relu(x @ w1 + b1)) @ w2 + b2
#   betti_ref : (B, F)    -- middle size-1 dim of betti_curves squeezed by BlockSpec
#   w1_ref    : (F, H)    unpadded (Mosaic tile-pads in VMEM)
#   b1_ref    : (1, H)
#   w2_ref    : (H, 128)  output-lane padded once at init (extra cols are zero)
#   b2_ref    : (1, 128)
#   o_ref     : (B, 128)  lane-dense output; real 16 cols sliced outside
# ---------------------------------------------------------------------------
def _fused_mlp_kernel(betti_ref, w1_ref, b1_ref, w2_ref, b2_ref, o_ref):
    x = betti_ref[...]
    h = jnp.dot(x, w1_ref[...],
                preferred_element_type=jnp.float32,
                precision=jax.lax.Precision.HIGHEST)
    h = jnp.maximum(h + b1_ref[...], 0.0)          # Linear1 + ReLU
    # Dropout(0.1): identity in eval mode.
    o = jnp.dot(h, w2_ref[...],
                preferred_element_type=jnp.float32,
                precision=jax.lax.Precision.HIGHEST)
    o_ref[...] = o + b2_ref[...]                   # Linear2


# ---------------------------------------------------------------------------
# Wrapper: one pallas_call, no per-call padding ops, slice real output columns
# ---------------------------------------------------------------------------
def betti_processor(betti_curves, prepared):
    """betti_curves: (B, 1, F) f32 -> (B, output_dim) f32 (fused Linear->ReLU->Linear)."""
    B, _, F = betti_curves.shape
    w1, b1 = prepared["w1"], prepared["b1"]
    w2_p, b2_p = prepared["w2_p"], prepared["b2_p"]
    H = w1.shape[1]
    Op = w2_p.shape[1]
    out_dim = prepared["out_dim"]

    out = pl.pallas_call(
        _fused_mlp_kernel,
        out_shape=jax.ShapeDtypeStruct((B, Op), jnp.float32),
        grid=(1,),
        in_specs=[
            # (B, 1, F) with the size-1 dim squeezed -> kernel sees (B, F);
            # block == full array dims, so the (8,128) rule is satisfied.
            pl.BlockSpec((B, None, F), lambda i: (0, 0, 0)),
            pl.BlockSpec((F, H), lambda i: (0, 0)),
            pl.BlockSpec((1, H), lambda i: (0, 0)),
            pl.BlockSpec((H, Op), lambda i: (0, 0)),
            pl.BlockSpec((1, Op), lambda i: (0, 0)),
        ],
        out_specs=pl.BlockSpec((B, Op), lambda i: (0, 0)),
        compiler_params=pltpu.CompilerParams(dimension_semantics=("arbitrary",)),
    )(betti_curves, w1, b1, w2_p, b2_p)
    return out[:, :out_dim]


# ---------------------------------------------------------------------------
# Parameters (PyTorch nn.Linear default init: U(-1/sqrt(fan_in), 1/sqrt(fan_in)))
# ---------------------------------------------------------------------------
def init_params(key, num_filtrations=NUM_FILTRATIONS,
                hidden_dim=HIDDEN_DIM, output_dim=OUTPUT_DIM):
    h = hidden_dim // 2
    k1, k2, k3, k4 = jax.random.split(key, 4)
    lim1 = 1.0 / (num_filtrations ** 0.5)
    lim2 = 1.0 / (h ** 0.5)
    return {
        "w1": jax.random.uniform(k1, (num_filtrations, h), jnp.float32, -lim1, lim1),
        "b1": jax.random.uniform(k2, (h,), jnp.float32, -lim1, lim1),
        "w2": jax.random.uniform(k3, (h, output_dim), jnp.float32, -lim2, lim2),
        "b2": jax.random.uniform(k4, (output_dim,), jnp.float32, -lim2, lim2),
    }


def prepare_params(params):
    """One-time layout prep (hoisted out of the per-call path).

    w1/b1 stay unpadded (full-array BlockSpecs; Mosaic pads natively in VMEM).
    w2/b2 output columns are zero-padded to a 128-lane multiple so the kernel's
    output stores are unmasked lane-dense; the padded columns compute exactly
    0 + 0 = 0 and are sliced off outside the kernel.
    """
    w1 = params["w1"].astype(jnp.float32)
    b1 = params["b1"].reshape(1, -1).astype(jnp.float32)
    w2 = params["w2"].astype(jnp.float32)
    b2 = params["b2"].astype(jnp.float32)
    H, O = w2.shape
    Op = _round_up(O, LANE)
    w2_p = jnp.zeros((H, Op), jnp.float32).at[:, :O].set(w2)
    b2_p = jnp.zeros((1, Op), jnp.float32).at[:, :O].set(b2.reshape(1, O))
    return {"w1": w1, "b1": b1, "w2_p": w2_p, "b2_p": b2_p, "out_dim": O}


# ---------------------------------------------------------------------------
# Forward pass (matches TinyTopologicalFeatureExtraction.forward)
# ---------------------------------------------------------------------------
def forward(prepared, x, rng_key, num_filtrations=NUM_FILTRATIONS):
    """x: (B, num_points, input_dim).  Returns (topo_features, {'betti_curves': ...})."""
    B = x.shape[0]
    # TinyPersistentHomologyLayer placeholder: torch.randn(B, 1, num_filtrations).
    betti_curves = jax.random.normal(rng_key, (B, 1, num_filtrations), jnp.float32)
    topo_features = betti_processor(betti_curves, prepared)
    return topo_features, {"betti_curves": betti_curves}


if __name__ == "__main__":
    key = jax.random.PRNGKey(0)
    kp, kx, kb = jax.random.split(key, 3)

    B, num_points, input_dim = 2, 8, 32
    params = init_params(kp)
    prepared = prepare_params(params)        # padding done once, not per forward
    x = jax.random.normal(kx, (B, num_points, input_dim), jnp.float32)

    fwd = jax.jit(lambda xx, kk: forward(prepared, xx, kk))
    topo, aux = fwd(x, kb)
    topo = jax.block_until_ready(topo)

    # shape / sanity checks
    assert topo.shape == (B, OUTPUT_DIM), topo.shape
    assert aux["betti_curves"].shape == (B, 1, NUM_FILTRATIONS)
    assert topo.dtype == jnp.float32
    assert bool(jnp.all(jnp.isfinite(topo)))

    # pure-JAX reference for the deterministic MLP part
    d0 = aux["betti_curves"][:, 0, :]
    hi = jnp.maximum(
        jnp.dot(d0, params["w1"], precision=jax.lax.Precision.HIGHEST) + params["b1"], 0.0)
    ref = jnp.dot(hi, params["w2"], precision=jax.lax.Precision.HIGHEST) + params["b2"]
    assert bool(jnp.allclose(topo, ref, atol=1e-5, rtol=1e-5)), \
        float(jnp.max(jnp.abs(topo - ref)))

    print("KERNEL_OK")
</pallas_src>

<mosaic_0001>
module attributes {stable_mosaic.version = 11 : i64} {
  func.func @_fused_mlp_kernel(%arg0: i32, %arg1: memref<2x1x10xf32, #tpu.memory_space<vmem>>, %arg2: memref<10x16xf32, #tpu.memory_space<vmem>>, %arg3: memref<1x16xf32, #tpu.memory_space<vmem>>, %arg4: memref<16x128xf32, #tpu.memory_space<vmem>>, %arg5: memref<1x128xf32, #tpu.memory_space<vmem>>, %arg6: memref<2x128xf32, #tpu.memory_space<vmem>>) attributes {dimension_semantics = [#tpu.dimension_semantics<arbitrary>], iteration_bounds = array<i64: 1>, scalar_prefetch = 0 : i64, scratch_operands = 0 : i64, tpu.core_type = #tpu.core_type<tc>, window_params = [{pipeline_mode = #tpu.pipeline_mode<synchronous>, transform_indices = @transform_0, window_bounds = array<i64: 2, 1, 10>}, {pipeline_mode = #tpu.pipeline_mode<synchronous>, transform_indices = @transform_1, window_bounds = array<i64: 10, 16>}, {pipeline_mode = #tpu.pipeline_mode<synchronous>, transform_indices = @transform_2, window_bounds = array<i64: 1, 16>}, {pipeline_mode = #tpu.pipeline_mode<synchronous>, transform_indices = @transform_3, window_bounds = array<i64: 16, 128>}, {pipeline_mode = #tpu.pipeline_mode<synchronous>, transform_indices = @transform_4, window_bounds = array<i64: 1, 128>}, {pipeline_mode = #tpu.pipeline_mode<synchronous>, transform_indices = @transform_5, window_bounds = array<i64: 2, 128>}]} {
    %c0 = arith.constant 0 : index
    %c0_0 = arith.constant 0 : index
    %c0_1 = arith.constant 0 : index
    %0 = vector.load %arg1[%c0, %c0_0, %c0_1] : memref<2x1x10xf32, #tpu.memory_space<vmem>>, vector<2x1x10xf32>
    %1 = vector.shape_cast %0 : vector<2x1x10xf32> to vector<2x10xf32>
    %c0_2 = arith.constant 0 : index
    %c0_3 = arith.constant 0 : index
    %2 = vector.load %arg2[%c0_2, %c0_3] : memref<10x16xf32, #tpu.memory_space<vmem>>, vector<10x16xf32>
    %cst = arith.constant dense<0.000000e+00> : vector<2x16xf32>
    %3 = tpu.matmul %1, %2, %cst {dimension_numbers = #tpu.dot_dimension_numbers<[1], [0], [0], [1], [0, 0, 1, 1], [], []>, precision = #tpu.contract_precision<fp32>} : vector<2x10xf32>, vector<10x16xf32>, vector<2x16xf32> -> vector<2x16xf32>
    %c0_4 = arith.constant 0 : index
    %c0_5 = arith.constant 0 : index
    %4 = vector.load %arg3[%c0_4, %c0_5] : memref<1x16xf32, #tpu.memory_space<vmem>>, vector<1x16xf32>
    %5 = vector.broadcast %4 : vector<1x16xf32> to vector<2x16xf32>
    %6 = arith.addf %3, %5 : vector<2x16xf32>
    %cst_6 = arith.constant 0.000000e+00 : f32
    %7 = vector.broadcast %cst_6 : f32 to vector<2x16xf32>
    %8 = arith.maximumf %6, %7 : vector<2x16xf32>
    %c0_7 = arith.constant 0 : index
    %c0_8 = arith.constant 0 : index
    %9 = vector.load %arg4[%c0_7, %c0_8] : memref<16x128xf32, #tpu.memory_space<vmem>>, vector<16x128xf32>
    %cst_9 = arith.constant dense<0.000000e+00> : vector<2x128xf32>
    %10 = tpu.matmul %8, %9, %cst_9 {dimension_numbers = #tpu.dot_dimension_numbers<[1], [0], [0], [1], [0, 0, 1, 1], [], []>, precision = #tpu.contract_precision<fp32>} : vector<2x16xf32>, vector<16x128xf32>, vector<2x128xf32> -> vector<2x128xf32>
    %c0_10 = arith.constant 0 : index
    %c0_11 = arith.constant 0 : index
    %11 = vector.load %arg5[%c0_10, %c0_11] : memref<1x128xf32, #tpu.memory_space<vmem>>, vector<1x128xf32>
    %12 = vector.broadcast %11 : vector<1x128xf32> to vector<2x128xf32>
    %13 = arith.addf %10, %12 : vector<2x128xf32>
    %c0_12 = arith.constant 0 : index
    %c0_13 = arith.constant 0 : index
    %14 = vector.load %arg6[%c0_12, %c0_13] : memref<2x128xf32, #tpu.memory_space<vmem>>, vector<2x128xf32>
    tpu.vector_store %arg6[%c0_12, %c0_13], %13 {strides = array<i32>} : memref<2x128xf32, #tpu.memory_space<vmem>>, vector<2x128xf32>,
    return
  }
  func.func @transform_0(%arg0: i32) -> (i32, i32, i32) {
    %c0_i32 = arith.constant 0 : i32
    %c0_i32_0 = arith.constant 0 : i32
    %c0_i32_1 = arith.constant 0 : i32
    %c0_i32_2 = arith.constant 0 : i32
    return %c0_i32, %c0_i32_0, %c0_i32_1 : i32, i32, i32
  }
  func.func @transform_1(%arg0: i32) -> (i32, i32) {
    %c0_i32 = arith.constant 0 : i32
    %c0_i32_0 = arith.constant 0 : i32
    %c0_i32_1 = arith.constant 0 : i32
    return %c0_i32, %c0_i32_0 : i32, i32
  }
  func.func @transform_2(%arg0: i32) -> (i32, i32) {
    %c0_i32 = arith.constant 0 : i32
    %c0_i32_0 = arith.constant 0 : i32
    %c0_i32_1 = arith.constant 0 : i32
    return %c0_i32, %c0_i32_0 : i32, i32
  }
  func.func @transform_3(%arg0: i32) -> (i32, i32) {
    %c0_i32 = arith.constant 0 : i32
    %c0_i32_0 = arith.constant 0 : i32
    %c0_i32_1 = arith.constant 0 : i32
    return %c0_i32, %c0_i32_0 : i32, i32
  }
  func.func @transform_4(%arg0: i32) -> (i32, i32) {
    %c0_i32 = arith.constant 0 : i32
    %c0_i32_0 = arith.constant 0 : i32
    %c0_i32_1 = arith.constant 0 : i32
    return %c0_i32, %c0_i32_0 : i32, i32
  }
  func.func @transform_5(%arg0: i32) -> (i32, i32) {
    %c0_i32 = arith.constant 0 : i32
    %c0_i32_0 = arith.constant 0 : i32
    %c0_i32_1 = arith.constant 0 : i32
    return %c0_i32, %c0_i32_0 : i32, i32
  }
}

</mosaic_0001>

<llo_original>
// kernel: _lambda_.1
$region0: #{_lambda_.1}
  #allocation0 [shape = 'u32[]', space=smem, size = 0x4, offset = 0x4, fixed_abs, tag = 'smem constant byte address 0x4 - core index']
  #allocation1 [shape = 'u32[144,128]{1,0:T(1,128)}', space=vmem, size = 0x12000, scoped, tag = 'internal scratch']
  %s0 = inlined_call_operand.vmem [shape: f32[2,1,10], index: 0, kind: input, shape index: {}]
  %s1 = inlined_call_operand.vmem [shape: f32[10,16], index: 1, kind: input, shape index: {}]
  %s2 = inlined_call_operand.vmem [shape: f32[1,16], index: 2, kind: input, shape index: {}]
  %s3 = inlined_call_operand.vmem [shape: f32[16,128], index: 3, kind: input, shape index: {}]
  %s4 = inlined_call_operand.vmem [shape: f32[1,128], index: 4, kind: input, shape index: {}]
  %s5 = inlined_call_operand.hbm [shape: f32[2,128], index: 5, kind: output, shape index: {}]
  %s6 = sld [smem:[#allocation0]]
  $region30: #{_lambda_.1} parent=0
    _
  %s8 = ssub.s32 1, %s6
  %s9 = scalar_select 0, %s8, %s6
  $region1: #{_lambda_.1} parent=0
    #allocation2 [shape = 'u8[1024]{0}', space=vmem, size = 0x400, scoped, tag = 'output window, operand 0, single buffered']
    #allocation3 [shape = 's32[1]{0}', space=sflag, size = 0x4, scoped, tag = 'scoped memory for _lambda_.1']
    %10 = vsyncpa [#allocation3], 0
    // Predicated region
    $region2: #{_lambda_.1} parent=1 // pred_check
      _
    $region3: #{_lambda_.1} parent=1 // pred_check_branch
      %12 = sbr.rel (0) target = $region5
    $region4: #{_lambda_.1} parent=1 // pred_region
      _
    $region5: #{_lambda_.1} parent=1 // pred_fallthru
      _
    // Predicated region
    $region6: #{_lambda_.1} parent=1 // pred_check
      _
    $region7: #{_lambda_.1} parent=1 // pred_check_branch
      %14 = sbr.rel (0) target = $region9
    $region8: #{_lambda_.1} parent=1 // pred_region
      _
    $region9: #{_lambda_.1} parent=1 // pred_fallthru
      _
    // Predicated region
    $region10: #{_lambda_.1} parent=1 // pred_check
      _
    $region11: #{_lambda_.1} parent=1 // pred_check_branch
      %16 = sbr.rel (0) target = $region13
    $region12: #{_lambda_.1} parent=1 // pred_region
      _
    $region13: #{_lambda_.1} parent=1 // pred_fallthru
      _
    // Predicated region
    $region14: #{_lambda_.1} parent=1 // pred_check
      _
    $region15: #{_lambda_.1} parent=1 // pred_check_branch
      %18 = sbr.rel (0) target = $region17
    $region16: #{_lambda_.1} parent=1 // pred_region
      _
    $region17: #{_lambda_.1} parent=1 // pred_fallthru
      _
    // Predicated region
    $region18: #{_lambda_.1} parent=1 // pred_check
      _
    $region19: #{_lambda_.1} parent=1 // pred_check_branch
      %20 = sbr.rel (0) target = $region21
    $region20: #{_lambda_.1} parent=1 // pred_region
      _
    $region21: #{_lambda_.1} parent=1 // pred_fallthru
      _
    %v21 = vld [vmem:[%s0] sm:$0x1]
    %v22 = vld [vmem:[%s0 + $0x1] sm:$0x1]
    %v23 = vld [vmem:[%s1] sm:$0xff]
    %v24 = vld [vmem:[%s1 + $0x8] sm:$0x3]
    %v25 = vld [vmem:[%s2] sm:$0x1]
    %v27 = vlaneseq
    %v28 = vshrl.u32 %v27, 7
    %v29 = vsub.s32 0, %v28
    %v30 = vrot.slane %v25, %v29
    %v34 = vcombine.low %v21, %v22
    %v36 = vunpack.c.l.s4 1966171168
    %v37 = vunpack.c.0.s8 %v36
    %v38 = vlaneseq
    %v39 = vshrl.u32 %v38, 7
    %v40 = vsub.s32 %v37, %v39
    %v41 = vrot.slane %v34, %v40
    %v43 = vunpack.c.l.s4 1966171168
    %v44 = vunpack.c.0.s8 %v43
    %v45 = vlaneseq
    %v46 = vshrl.u32 %v45, 7
    %v47 = vsub.s32 %v44, %v46
    %v48 = vrot.slane %v41, %v47
    %vm49 = vcmask 80896
    %v50 = vsel %vm49, %v48, 0
    %vm52 = vcmask 1041408
    %v54 = vsel %vm52, %v24, 0
    %56 = vmatprep.subr.mxu0 0.0
    %57 = vmatpush1.msra.mxu0 0.0
    %58 = vmatprep.subr.mxu0 0.0
    %59 = vmatpush1.msra.mxu0 0.0
    %60 = vmatprep.subr.mxu0 0.0
    %61 = vmatpush1.msra.mxu0 0.0
    %62 = vmatprep.subr.mxu0 0.0
    %63 = vmatpush1.msra.mxu0 0.0
    %64 = vmatprep.subr.mxu0 0.0
    %65 = vmatpush1.msra.mxu0 0.0
    %66 = vmatprep.subr.mxu0 0.0
    %67 = vmatpush1.msra.mxu0 0.0
    %68 = vmatprep.subr.mxu0 0.0
    %69 = vmatpush1.msra.mxu0 0.0
    %70 = vmatprep.subr.mxu0 0.0
    %71 = vmatpush1.msra.mxu0 0.0
    %72 = vmatprep.subr.mxu0 0.0
    %73 = vmatpush1.msra.mxu0 0.0
    %74 = vmatprep.subr.mxu0 0.0
    %75 = vmatpush1.msra.mxu0 0.0
    %76 = vmatprep.subr.mxu0 0.0
    %77 = vmatpush1.msra.mxu0 0.0
    %78 = vmatprep.subr.mxu0 0.0
    %79 = vmatpush1.msra.mxu0 0.0
    %80 = vmatprep.subr.mxu0 0.0
    %81 = vmatpush1.msra.mxu0 0.0
    %82 = vmatprep.subr.mxu0 0.0
    %83 = vmatpush1.msra.mxu0 0.0
    %84 = vmatprep.subr.mxu0 0.0
    %v85 = vand.u32 %v54, 4294901760
    %86 = vmatpush1.msra.mxu0 %v85
    %87 = vmatprep.subr.mxu0 0.0
    %v88 = vand.u32 %v23, 4294901760
    %89 = vmatpush1.msra.mxu0 %v88
    %90 = vmatprep.subr.mxu0 0.0
    %91 = vmatpush2.msra.mxu0 0.0
    %92 = vmatprep.subr.mxu0 0.0
    %93 = vmatpush2.msra.mxu0 0.0
    %94 = vmatprep.subr.mxu0 0.0
    %95 = vmatpush2.msra.mxu0 0.0
    %96 = vmatprep.subr.mxu0 0.0
    %97 = vmatpush2.msra.mxu0 0.0
    %98 = vmatprep.subr.mxu0 0.0
    %99 = vmatpush2.msra.mxu0 0.0
    %100 = vmatprep.subr.mxu0 0.0
    %101 = vmatpush2.msra.mxu0 0.0
    %102 = vmatprep.subr.mxu0 0.0
    %103 = vmatpush2.msra.mxu0 0.0
    %104 = vmatprep.subr.mxu0 0.0
    %105 = vmatpush2.msra.mxu0 0.0
    %106 = vmatprep.subr.mxu0 0.0
    %107 = vmatpush2.msra.mxu0 0.0
    %108 = vmatprep.subr.mxu0 0.0
    %109 = vmatpush2.msra.mxu0 0.0
    %110 = vmatprep.subr.mxu0 0.0
    %111 = vmatpush2.msra.mxu0 0.0
    %112 = vmatprep.subr.mxu0 0.0
    %113 = vmatpush2.msra.mxu0 0.0
    %114 = vmatprep.subr.mxu0 0.0
    %115 = vmatpush2.msra.mxu0 0.0
    %116 = vmatprep.subr.mxu0 0.0
    %117 = vmatpush2.msra.mxu0 0.0
    %118 = vmatprep.subr.mxu0 0.0
    %119 = vmatpush2.msra.mxu0 0.0
    %120 = vmatprep.subr.mxu0 0.0
    %121 = vmatpush2.msra.mxu0 0.0
    %122 = vmatprep.mubr.f32.mxu0 0.0
    %v123 = vand.u32 %v50, 4294901760
    %v124 = vsub.f32 %v50, %v123
    %v125 = vand.u32 %v124, 4294901760
    %v126 = vsub.f32 %v124, %v125
    %v127 = vand.u32 %v126, 4294901760
    %128 = vmatmul.mubr.f32.gmra.mxu0 %v127
    %v129 = vpop.f32.mrf.mxu0
    %v130 = vadd.f32 %v30, %v129
    %v131 = vpop.f32.mrf.mxu0
    %132 = vdwg.mxu0
    %133 = vmatprep.subr.mxu0 0.0
    %134 = vmatpush1.msra.mxu0 0.0
    %135 = vmatprep.subr.mxu0 0.0
    %136 = vmatpush1.msra.mxu0 0.0
    %137 = vmatprep.subr.mxu0 0.0
    %138 = vmatpush1.msra.mxu0 0.0
    %139 = vmatprep.subr.mxu0 0.0
    %140 = vmatpush1.msra.mxu0 0.0
    %141 = vmatprep.subr.mxu0 0.0
    %142 = vmatpush1.msra.mxu0 0.0
    %143 = vmatprep.subr.mxu0 0.0
    %144 = vmatpush1.msra.mxu0 0.0
    %145 = vmatprep.subr.mxu0 0.0
    %146 = vmatpush1.msra.mxu0 0.0
    %147 = vmatprep.subr.mxu0 0.0
    %148 = vmatpush1.msra.mxu0 0.0
    %149 = vmatprep.subr.mxu0 0.0
    %150 = vmatpush1.msra.mxu0 0.0
    %151 = vmatprep.subr.mxu0 0.0
    %152 = vmatpush1.msra.mxu0 0.0
    %153 = vmatprep.subr.mxu0 0.0
    %154 = vmatpush1.msra.mxu0 0.0
    %155 = vmatprep.subr.mxu0 0.0
    %156 = vmatpush1.msra.mxu0 0.0
    %157 = vmatprep.subr.mxu0 0.0
    %158 = vmatpush1.msra.mxu0 0.0
    %159 = vmatprep.subr.mxu0 0.0
    %160 = vmatpush1.msra.mxu0 0.0
    %161 = vmatprep.subr.mxu0 0.0
    %v162 = vand.u32 %v54, 4294901760
    %v163 = vsub.f32 %v54, %v162
    %v164 = vand.u32 %v163, 4294901760
    %v165 = vsub.f32 %v163, %v164
    %v166 = vand.u32 %v165, 4294901760
    %167 = vmatpush1.msra.mxu0 %v166
    %168 = vmatprep.subr.mxu0 0.0
    %v169 = vand.u32 %v23, 4294901760
    %v170 = vsub.f32 %v23, %v169
    %v171 = vand.u32 %v170, 4294901760
    %v172 = vsub.f32 %v170, %v171
    %v173 = vand.u32 %v172, 4294901760
    %174 = vmatpush1.msra.mxu0 %v173
    %175 = vmatprep.subr.mxu0 0.0
    %176 = vmatpush2.msra.mxu0 0.0
    %177 = vmatprep.subr.mxu0 0.0
    %178 = vmatpush2.msra.mxu0 0.0
    %179 = vmatprep.subr.mxu0 0.0
    %180 = vmatpush2.msra.mxu0 0.0
    %181 = vmatprep.subr.mxu0 0.0
    %182 = vmatpush2.msra.mxu0 0.0
    %183 = vmatprep.subr.mxu0 0.0
    %184 = vmatpush2.msra.mxu0 0.0
    %185 = vmatprep.subr.mxu0 0.0
    %186 = vmatpush2.msra.mxu0 0.0
    %187 = vmatprep.subr.mxu0 0.0
    %188 = vmatpush2.msra.mxu0 0.0
    %189 = vmatprep.subr.mxu0 0.0
    %190 = vmatpush2.msra.mxu0 0.0
    %191 = vmatprep.subr.mxu0 0.0
    %192 = vmatpush2.msra.mxu0 0.0
    %193 = vmatprep.subr.mxu0 0.0
    %194 = vmatpush2.msra.mxu0 0.0
    %195 = vmatprep.subr.mxu0 0.0
    %196 = vmatpush2.msra.mxu0 0.0
    %197 = vmatprep.subr.mxu0 0.0
    %198 = vmatpush2.msra.mxu0 0.0
    %199 = vmatprep.subr.mxu0 0.0
    %200 = vmatpush2.msra.mxu0 0.0
    %201 = vmatprep.subr.mxu0 0.0
    %202 = vmatpush2.msra.mxu0 0.0
    %203 = vmatprep.subr.mxu0 0.0
    %204 = vmatpush2.msra.mxu0 0.0
    %205 = vmatprep.subr.mxu0 0.0
    %206 = vmatpush2.msra.mxu0 0.0
    %207 = vmatprep.mubr.f32.mxu0 0.0
    %v208 = vand.u32 %v50, 4294901760
    %209 = vmatmul.mubr.f32.gmra.mxu0 %v208
    %v210 = vpop.f32.mrf.mxu0
    %v211 = vadd.f32 %v130, %v210
    %v212 = vpop.f32.mrf.mxu0
    %213 = vdwg.mxu0
    %214 = vmatprep.subr.mxu0 0.0
    %215 = vmatpush1.msra.mxu0 0.0
    %216 = vmatprep.subr.mxu0 0.0
    %217 = vmatpush1.msra.mxu0 0.0
    %218 = vmatprep.subr.mxu0 0.0
    %219 = vmatpush1.msra.mxu0 0.0
    %220 = vmatprep.subr.mxu0 0.0
    %221 = vmatpush1.msra.mxu0 0.0
    %222 = vmatprep.subr.mxu0 0.0
    %223 = vmatpush1.msra.mxu0 0.0
    %224 = vmatprep.subr.mxu0 0.0
    %225 = vmatpush1.msra.mxu0 0.0
    %226 = vmatprep.subr.mxu0 0.0
    %227 = vmatpush1.msra.mxu0 0.0
    %228 = vmatprep.subr.mxu0 0.0
    %229 = vmatpush1.msra.mxu0 0.0
    %230 = vmatprep.subr.mxu0 0.0
    %231 = vmatpush1.msra.mxu0 0.0
    %232 = vmatprep.subr.mxu0 0.0
    %233 = vmatpush1.msra.mxu0 0.0
    %234 = vmatprep.subr.mxu0 0.0
    %235 = vmatpush1.msra.mxu0 0.0
    %236 = vmatprep.subr.mxu0 0.0
    %237 = vmatpush1.msra.mxu0 0.0
    %238 = vmatprep.subr.mxu0 0.0
    %239 = vmatpush1.msra.mxu0 0.0
    %240 = vmatprep.subr.mxu0 0.0
    %241 = vmatpush1.msra.mxu0 0.0
    %242 = vmatprep.subr.mxu0 0.0
    %v243 = vand.u32 %v54, 4294901760
    %v244 = vsub.f32 %v54, %v243
    %245 = vmatpush1.msra.mxu0 %v244
    %246 = vmatprep.subr.mxu0 0.0
    %v247 = vand.u32 %v23, 4294901760
    %v248 = vsub.f32 %v23, %v247
    %249 = vmatpush1.msra.mxu0 %v248
    %250 = vmatprep.subr.mxu0 0.0
    %251 = vmatpush2.msra.mxu0 0.0
    %252 = vmatprep.subr.mxu0 0.0
    %253 = vmatpush2.msra.mxu0 0.0
    %254 = vmatprep.subr.mxu0 0.0
    %255 = vmatpush2.msra.mxu0 0.0
    %256 = vmatprep.subr.mxu0 0.0
    %257 = vmatpush2.msra.mxu0 0.0
    %258 = vmatprep.subr.mxu0 0.0
    %259 = vmatpush2.msra.mxu0 0.0
    %260 = vmatprep.subr.mxu0 0.0
    %261 = vmatpush2.msra.mxu0 0.0
    %262 = vmatprep.subr.mxu0 0.0
    %263 = vmatpush2.msra.mxu0 0.0
    %264 = vmatprep.subr.mxu0 0.0
    %265 = vmatpush2.msra.mxu0 0.0
    %266 = vmatprep.subr.mxu0 0.0
    %267 = vmatpush2.msra.mxu0 0.0
    %268 = vmatprep.subr.mxu0 0.0
    %269 = vmatpush2.msra.mxu0 0.0
    %270 = vmatprep.subr.mxu0 0.0
    %271 = vmatpush2.msra.mxu0 0.0
    %272 = vmatprep.subr.mxu0 0.0
    %273 = vmatpush2.msra.mxu0 0.0
    %274 = vmatprep.subr.mxu0 0.0
    %275 = vmatpush2.msra.mxu0 0.0
    %276 = vmatprep.subr.mxu0 0.0
    %277 = vmatpush2.msra.mxu0 0.0
    %278 = vmatprep.subr.mxu0 0.0
    %279 = vmatpush2.msra.mxu0 0.0
    %280 = vmatprep.subr.mxu0 0.0
    %281 = vmatpush2.msra.mxu0 0.0
    %282 = vmatprep.mubr.f32.mxu0 0.0
    %v283 = vand.u32 %v50, 4294901760
    %v284 = vsub.f32 %v50, %v283
    %285 = vmatmul.mubr.f32.gmra.mxu0 %v284
    %v286 = vpop.f32.mrf.mxu0
    %v287 = vadd.f32 %v211, %v286
    %v288 = vpop.f32.mrf.mxu0
    %289 = vdwg.mxu0
    %290 = vmatprep.subr.mxu0 0.0
    %291 = vmatpush1.msra.mxu0 0.0
    %292 = vmatprep.subr.mxu0 0.0
    %293 = vmatpush1.msra.mxu0 0.0
    %294 = vmatprep.subr.mxu0 0.0
    %295 = vmatpush1.msra.mxu0 0.0
    %296 = vmatprep.subr.mxu0 0.0
    %297 = vmatpush1.msra.mxu0 0.0
    %298 = vmatprep.subr.mxu0 0.0
    %299 = vmatpush1.msra.mxu0 0.0
    %300 = vmatprep.subr.mxu0 0.0
    %301 = vmatpush1.msra.mxu0 0.0
    %302 = vmatprep.subr.mxu0 0.0
    %303 = vmatpush1.msra.mxu0 0.0
    %304 = vmatprep.subr.mxu0 0.0
    %305 = vmatpush1.msra.mxu0 0.0
    %306 = vmatprep.subr.mxu0 0.0
    %307 = vmatpush1.msra.mxu0 0.0
    %308 = vmatprep.subr.mxu0 0.0
    %309 = vmatpush1.msra.mxu0 0.0
    %310 = vmatprep.subr.mxu0 0.0
    %311 = vmatpush1.msra.mxu0 0.0
    %312 = vmatprep.subr.mxu0 0.0
    %313 = vmatpush1.msra.mxu0 0.0
    %314 = vmatprep.subr.mxu0 0.0
    %315 = vmatpush1.msra.mxu0 0.0
    %316 = vmatprep.subr.mxu0 0.0
    %317 = vmatpush1.msra.mxu0 0.0
    %318 = vmatprep.subr.mxu0 0.0
    %v319 = vand.u32 %v54, 4294901760
    %320 = vmatpush1.msra.mxu0 %v319
    %321 = vmatprep.subr.mxu0 0.0
    %v322 = vand.u32 %v23, 4294901760
    %323 = vmatpush1.msra.mxu0 %v322
    %324 = vmatprep.subr.mxu0 0.0
    %325 = vmatpush2.msra.mxu0 0.0
    %326 = vmatprep.subr.mxu0 0.0
    %327 = vmatpush2.msra.mxu0 0.0
    %328 = vmatprep.subr.mxu0 0.0
    %329 = vmatpush2.msra.mxu0 0.0
    %330 = vmatprep.subr.mxu0 0.0
    %331 = vmatpush2.msra.mxu0 0.0
    %332 = vmatprep.subr.mxu0 0.0
    %333 = vmatpush2.msra.mxu0 0.0
    %334 = vmatprep.subr.mxu0 0.0
    %335 = vmatpush2.msra.mxu0 0.0
    %336 = vmatprep.subr.mxu0 0.0
    %337 = vmatpush2.msra.mxu0 0.0
    %338 = vmatprep.subr.mxu0 0.0
    %339 = vmatpush2.msra.mxu0 0.0
    %340 = vmatprep.subr.mxu0 0.0
    %341 = vmatpush2.msra.mxu0 0.0
    %342 = vmatprep.subr.mxu0 0.0
    %343 = vmatpush2.msra.mxu0 0.0
    %344 = vmatprep.subr.mxu0 0.0
    %345 = vmatpush2.msra.mxu0 0.0
    %346 = vmatprep.subr.mxu0 0.0
    %347 = vmatpush2.msra.mxu0 0.0
    %348 = vmatprep.subr.mxu0 0.0
    %349 = vmatpush2.msra.mxu0 0.0
    %350 = vmatprep.subr.mxu0 0.0
    %351 = vmatpush2.msra.mxu0 0.0
    %352 = vmatprep.subr.mxu0 0.0
    %353 = vmatpush2.msra.mxu0 0.0
    %354 = vmatprep.subr.mxu0 0.0
    %355 = vmatpush2.msra.mxu0 0.0
    %356 = vmatprep.mubr.f32.mxu0 0.0
    %v357 = vand.u32 %v50, 4294901760
    %v358 = vsub.f32 %v50, %v357
    %v359 = vand.u32 %v358, 4294901760
    %360 = vmatmul.mubr.f32.gmra.mxu0 %v359
    %v361 = vpop.f32.mrf.mxu0
    %v362 = vadd.f32 %v287, %v361
    %v363 = vpop.f32.mrf.mxu0
    %364 = vdwg.mxu0
    %365 = vmatprep.subr.mxu0 0.0
    %366 = vmatpush1.msra.mxu0 0.0
    %367 = vmatprep.subr.mxu0 0.0
    %368 = vmatpush1.msra.mxu0 0.0
    %369 = vmatprep.subr.mxu0 0.0
    %370 = vmatpush1.msra.mxu0 0.0
    %371 = vmatprep.subr.mxu0 0.0
    %372 = vmatpush1.msra.mxu0 0.0
    %373 = vmatprep.subr.mxu0 0.0
    %374 = vmatpush1.msra.mxu0 0.0
    %375 = vmatprep.subr.mxu0 0.0
    %376 = vmatpush1.msra.mxu0 0.0
    %377 = vmatprep.subr.mxu0 0.0
    %378 = vmatpush1.msra.mxu0 0.0
    %379 = vmatprep.subr.mxu0 0.0
    %380 = vmatpush1.msra.mxu0 0.0
    %381 = vmatprep.subr.mxu0 0.0
    %382 = vmatpush1.msra.mxu0 0.0
    %383 = vmatprep.subr.mxu0 0.0
    %384 = vmatpush1.msra.mxu0 0.0
    %385 = vmatprep.subr.mxu0 0.0
    %386 = vmatpush1.msra.mxu0 0.0
    %387 = vmatprep.subr.mxu0 0.0
    %388 = vmatpush1.msra.mxu0 0.0
    %389 = vmatprep.subr.mxu0 0.0
    %390 = vmatpush1.msra.mxu0 0.0
    %391 = vmatprep.subr.mxu0 0.0
    %392 = vmatpush1.msra.mxu0 0.0
    %393 = vmatprep.subr.mxu0 0.0
    %v394 = vand.u32 %v54, 4294901760
    %v395 = vsub.f32 %v54, %v394
    %v396 = vand.u32 %v395, 4294901760
    %397 = vmatpush1.msra.mxu0 %v396
    %398 = vmatprep.subr.mxu0 0.0
    %v399 = vand.u32 %v23, 4294901760
    %v400 = vsub.f32 %v23, %v399
    %v401 = vand.u32 %v400, 4294901760
    %402 = vmatpush1.msra.mxu0 %v401
    %403 = vmatprep.subr.mxu0 0.0
    %404 = vmatpush2.msra.mxu0 0.0
    %405 = vmatprep.subr.mxu0 0.0
    %406 = vmatpush2.msra.mxu0 0.0
    %407 = vmatprep.subr.mxu0 0.0
    %408 = vmatpush2.msra.mxu0 0.0
    %409 = vmatprep.subr.mxu0 0.0
    %410 = vmatpush2.msra.mxu0 0.0
    %411 = vmatprep.subr.mxu0 0.0
    %412 = vmatpush2.msra.mxu0 0.0
    %413 = vmatprep.subr.mxu0 0.0
    %414 = vmatpush2.msra.mxu0 0.0
    %415 = vmatprep.subr.mxu0 0.0
    %416 = vmatpush2.msra.mxu0 0.0
    %417 = vmatprep.subr.mxu0 0.0
    %418 = vmatpush2.msra.mxu0 0.0
    %419 = vmatprep.subr.mxu0 0.0
    %420 = vmatpush2.msra.mxu0 0.0
    %421 = vmatprep.subr.mxu0 0.0
    %422 = vmatpush2.msra.mxu0 0.0
    %423 = vmatprep.subr.mxu0 0.0
    %424 = vmatpush2.msra.mxu0 0.0
    %425 = vmatprep.subr.mxu0 0.0
    %426 = vmatpush2.msra.mxu0 0.0
    %427 = vmatprep.subr.mxu0 0.0
    %428 = vmatpush2.msra.mxu0 0.0
    %429 = vmatprep.subr.mxu0 0.0
    %430 = vmatpush2.msra.mxu0 0.0
    %431 = vmatprep.subr.mxu0 0.0
    %432 = vmatpush2.msra.mxu0 0.0
    %433 = vmatprep.subr.mxu0 0.0
    %434 = vmatpush2.msra.mxu0 0.0
    %435 = vmatprep.mubr.f32.mxu0 0.0
    %v436 = vand.u32 %v50, 4294901760
    %437 = vmatmul.mubr.f32.gmra.mxu0 %v436
    %v438 = vpop.f32.mrf.mxu0
    %v439 = vadd.f32 %v362, %v438
    %v440 = vpop.f32.mrf.mxu0
    %441 = vdwg.mxu0
    %442 = vmatprep.subr.mxu0 0.0
    %443 = vmatpush1.msra.mxu0 0.0
    %444 = vmatprep.subr.mxu0 0.0
    %445 = vmatpush1.msra.mxu0 0.0
    %446 = vmatprep.subr.mxu0 0.0
    %447 = vmatpush1.msra.mxu0 0.0
    %448 = vmatprep.subr.mxu0 0.0
    %449 = vmatpush1.msra.mxu0 0.0
    %450 = vmatprep.subr.mxu0 0.0
    %451 = vmatpush1.msra.mxu0 0.0
    %452 = vmatprep.subr.mxu0 0.0
    %453 = vmatpush1.msra.mxu0 0.0
    %454 = vmatprep.subr.mxu0 0.0
    %455 = vmatpush1.msra.mxu0 0.0
    %456 = vmatprep.subr.mxu0 0.0
    %457 = vmatpush1.msra.mxu0 0.0
    %458 = vmatprep.subr.mxu0 0.0
    %459 = vmatpush1.msra.mxu0 0.0
    %460 = vmatprep.subr.mxu0 0.0
    %461 = vmatpush1.msra.mxu0 0.0
    %462 = vmatprep.subr.mxu0 0.0
    %463 = vmatpush1.msra.mxu0 0.0
    %464 = vmatprep.subr.mxu0 0.0
    %465 = vmatpush1.msra.mxu0 0.0
    %466 = vmatprep.subr.mxu0 0.0
    %467 = vmatpush1.msra.mxu0 0.0
    %468 = vmatprep.subr.mxu0 0.0
    %469 = vmatpush1.msra.mxu0 0.0
    %470 = vmatprep.subr.mxu0 0.0
    %v471 = vand.u32 %v54, 4294901760
    %472 = vmatpush1.msra.mxu0 %v471
    %473 = vmatprep.subr.mxu0 0.0
    %v474 = vand.u32 %v23, 4294901760
    %475 = vmatpush1.msra.mxu0 %v474
    %476 = vmatprep.subr.mxu0 0.0
    %477 = vmatpush2.msra.mxu0 0.0
    %478 = vmatprep.subr.mxu0 0.0
    %479 = vmatpush2.msra.mxu0 0.0
    %480 = vmatprep.subr.mxu0 0.0
    %481 = vmatpush2.msra.mxu0 0.0
    %482 = vmatprep.subr.mxu0 0.0
    %483 = vmatpush2.msra.mxu0 0.0
    %484 = vmatprep.subr.mxu0 0.0
    %485 = vmatpush2.msra.mxu0 0.0
    %486 = vmatprep.subr.mxu0 0.0
    %487 = vmatpush2.msra.mxu0 0.0
    %488 = vmatprep.subr.mxu0 0.0
    %489 = vmatpush2.msra.mxu0 0.0
    %490 = vmatprep.subr.mxu0 0.0
    %491 = vmatpush2.msra.mxu0 0.0
    %492 = vmatprep.subr.mxu0 0.0
    %493 = vmatpush2.msra.mxu0 0.0
    %494 = vmatprep.subr.mxu0 0.0
    %495 = vmatpush2.msra.mxu0 0.0
    %496 = vmatprep.subr.mxu0 0.0
    %497 = vmatpush2.msra.mxu0 0.0
    %498 = vmatprep.subr.mxu0 0.0
    %499 = vmatpush2.msra.mxu0 0.0
    %500 = vmatprep.subr.mxu0 0.0
    %501 = vmatpush2.msra.mxu0 0.0
    %502 = vmatprep.subr.mxu0 0.0
    %503 = vmatpush2.msra.mxu0 0.0
    %504 = vmatprep.subr.mxu0 0.0
    %505 = vmatpush2.msra.mxu0 0.0
    %506 = vmatprep.subr.mxu0 0.0
    %507 = vmatpush2.msra.mxu0 0.0
    %508 = vmatprep.mubr.f32.mxu0 0.0
    %v509 = vand.u32 %v50, 4294901760
    %510 = vmatmul.mubr.f32.gmra.mxu0 %v509
    %v511 = vpop.f32.mrf.mxu0
    %v512 = vadd.f32 %v439, %v511
    %v513 = vpop.f32.mrf.mxu0
    %514 = vdwg.mxu0
    %v515 = vmax.f32 %v512, 0.0
    %v516 = vld [vmem:[%s3] sm:$0xff]
    %v517 = vld [vmem:[%s3 + $0x8] sm:$0xff]
    %v518 = vld [vmem:[%s4] sm:$0x1]
    %v520 = vlaneseq
    %v521 = vshrl.u32 %v520, 7
    %v522 = vsub.s32 0, %v521
    %v523 = vrot.slane %v518, %v522
    %vm525 = vcmask 130048
    %v527 = vsel %vm525, %v515, 0
    %529 = vmatprep.subr.mxu0 0.0
    %530 = vmatpush1.msra.mxu0 0.0
    %531 = vmatprep.subr.mxu0 0.0
    %532 = vmatpush1.msra.mxu0 0.0
    %533 = vmatprep.subr.mxu0 0.0
    %534 = vmatpush1.msra.mxu0 0.0
    %535 = vmatprep.subr.mxu0 0.0
    %536 = vmatpush1.msra.mxu0 0.0
    %537 = vmatprep.subr.mxu0 0.0
    %538 = vmatpush1.msra.mxu0 0.0
    %539 = vmatprep.subr.mxu0 0.0
    %540 = vmatpush1.msra.mxu0 0.0
    %541 = vmatprep.subr.mxu0 0.0
    %542 = vmatpush1.msra.mxu0 0.0
    %543 = vmatprep.subr.mxu0 0.0
    %544 = vmatpush1.msra.mxu0 0.0
    %545 = vmatprep.subr.mxu0 0.0
    %546 = vmatpush1.msra.mxu0 0.0
    %547 = vmatprep.subr.mxu0 0.0
    %548 = vmatpush1.msra.mxu0 0.0
    %549 = vmatprep.subr.mxu0 0.0
    %550 = vmatpush1.msra.mxu0 0.0
    %551 = vmatprep.subr.mxu0 0.0
    %552 = vmatpush1.msra.mxu0 0.0
    %553 = vmatprep.subr.mxu0 0.0
    %554 = vmatpush1.msra.mxu0 0.0
    %555 = vmatprep.subr.mxu0 0.0
    %556 = vmatpush1.msra.mxu0 0.0
    %557 = vmatprep.subr.mxu0 0.0
    %v558 = vand.u32 %v517, 4294901760
    %559 = vmatpush1.msra.mxu0 %v558
    %560 = vmatprep.subr.mxu0 0.0
    %v561 = vand.u32 %v516, 4294901760
    %562 = vmatpush1.msra.mxu0 %v561
    %563 = vmatprep.subr.mxu0 0.0
    %564 = vmatpush2.msra.mxu0 0.0
    %565 = vmatprep.subr.mxu0 0.0
    %566 = vmatpush2.msra.mxu0 0.0
    %567 = vmatprep.subr.mxu0 0.0
    %568 = vmatpush2.msra.mxu0 0.0
    %569 = vmatprep.subr.mxu0 0.0
    %570 = vmatpush2.msra.mxu0 0.0
    %571 = vmatprep.subr.mxu0 0.0
    %572 = vmatpush2.msra.mxu0 0.0
    %573 = vmatprep.subr.mxu0 0.0
    %574 = vmatpush2.msra.mxu0 0.0
    %575 = vmatprep.subr.mxu0 0.0
    %576 = vmatpush2.msra.mxu0 0.0
    %577 = vmatprep.subr.mxu0 0.0
    %578 = vmatpush2.msra.mxu0 0.0
    %579 = vmatprep.subr.mxu0 0.0
    %580 = vmatpush2.msra.mxu0 0.0
    %581 = vmatprep.subr.mxu0 0.0
    %582 = vmatpush2.msra.mxu0 0.0
    %583 = vmatprep.subr.mxu0 0.0
    %584 = vmatpush2.msra.mxu0 0.0
    %585 = vmatprep.subr.mxu0 0.0
    %586 = vmatpush2.msra.mxu0 0.0
    %587 = vmatprep.subr.mxu0 0.0
    %588 = vmatpush2.msra.mxu0 0.0
    %589 = vmatprep.subr.mxu0 0.0
    %590 = vmatpush2.msra.mxu0 0.0
    %591 = vmatprep.subr.mxu0 0.0
    %592 = vmatpush2.msra.mxu0 0.0
    %593 = vmatprep.subr.mxu0 0.0
    %594 = vmatpush2.msra.mxu0 0.0
    %595 = vmatprep.mubr.f32.mxu0 0.0
    %v596 = vand.u32 %v527, 4294901760
    %v597 = vsub.f32 %v527, %v596
    %v598 = vand.u32 %v597, 4294901760
    %v599 = vsub.f32 %v597, %v598
    %v600 = vand.u32 %v599, 4294901760
    %601 = vmatmul.mubr.f32.gmra.mxu0 %v600
    %v602 = vpop.f32.mrf.mxu0
    %v603 = vadd.f32 %v523, %v602
    %v604 = vpop.f32.mrf.mxu0
    %605 = vdwg.mxu0
    %606 = vmatprep.subr.mxu0 0.0
    %607 = vmatpush1.msra.mxu0 0.0
    %608 = vmatprep.subr.mxu0 0.0
    %609 = vmatpush1.msra.mxu0 0.0
    %610 = vmatprep.subr.mxu0 0.0
    %611 = vmatpush1.msra.mxu0 0.0
    %612 = vmatprep.subr.mxu0 0.0
    %613 = vmatpush1.msra.mxu0 0.0
    %614 = vmatprep.subr.mxu0 0.0
    %615 = vmatpush1.msra.mxu0 0.0
    %616 = vmatprep.subr.mxu0 0.0
    %617 = vmatpush1.msra.mxu0 0.0
    %618 = vmatprep.subr.mxu0 0.0
    %619 = vmatpush1.msra.mxu0 0.0
    %620 = vmatprep.subr.mxu0 0.0
    %621 = vmatpush1.msra.mxu0 0.0
    %622 = vmatprep.subr.mxu0 0.0
    %623 = vmatpush1.msra.mxu0 0.0
    %624 = vmatprep.subr.mxu0 0.0
    %625 = vmatpush1.msra.mxu0 0.0
    %626 = vmatprep.subr.mxu0 0.0
    %627 = vmatpush1.msra.mxu0 0.0
    %628 = vmatprep.subr.mxu0 0.0
    %629 = vmatpush1.msra.mxu0 0.0
    %630 = vmatprep.subr.mxu0 0.0
    %631 = vmatpush1.msra.mxu0 0.0
    %632 = vmatprep.subr.mxu0 0.0
    %633 = vmatpush1.msra.mxu0 0.0
    %634 = vmatprep.subr.mxu0 0.0
    %v635 = vand.u32 %v517, 4294901760
    %v636 = vsub.f32 %v517, %v635
    %v637 = vand.u32 %v636, 4294901760
    %v638 = vsub.f32 %v636, %v637
    %v639 = vand.u32 %v638, 4294901760
    %640 = vmatpush1.msra.mxu0 %v639
    %641 = vmatprep.subr.mxu0 0.0
    %v642 = vand.u32 %v516, 4294901760
    %v643 = vsub.f32 %v516, %v642
    %v644 = vand.u32 %v643, 4294901760
    %v645 = vsub.f32 %v643, %v644
    %v646 = vand.u32 %v645, 4294901760
    %647 = vmatpush1.msra.mxu0 %v646
    %648 = vmatprep.subr.mxu0 0.0
    %649 = vmatpush2.msra.mxu0 0.0
    %650 = vmatprep.subr.mxu0 0.0
    %651 = vmatpush2.msra.mxu0 0.0
    %652 = vmatprep.subr.mxu0 0.0
    %653 = vmatpush2.msra.mxu0 0.0
    %654 = vmatprep.subr.mxu0 0.0
    %655 = vmatpush2.msra.mxu0 0.0
    %656 = vmatprep.subr.mxu0 0.0
    %657 = vmatpush2.msra.mxu0 0.0
    %658 = vmatprep.subr.mxu0 0.0
    %659 = vmatpush2.msra.mxu0 0.0
    %660 = vmatprep.subr.mxu0 0.0
    %661 = vmatpush2.msra.mxu0 0.0
    %662 = vmatprep.subr.mxu0 0.0
    %663 = vmatpush2.msra.mxu0 0.0
    %664 = vmatprep.subr.mxu0 0.0
    %665 = vmatpush2.msra.mxu0 0.0
    %666 = vmatprep.subr.mxu0 0.0
    %667 = vmatpush2.msra.mxu0 0.0
    %668 = vmatprep.subr.mxu0 0.0
    %669 = vmatpush2.msra.mxu0 0.0
    %670 = vmatprep.subr.mxu0 0.0
    %671 = vmatpush2.msra.mxu0 0.0
    %672 = vmatprep.subr.mxu0 0.0
    %673 = vmatpush2.msra.mxu0 0.0
    %674 = vmatprep.subr.mxu0 0.0
    %675 = vmatpush2.msra.mxu0 0.0
    %676 = vmatprep.subr.mxu0 0.0
    %677 = vmatpush2.msra.mxu0 0.0
    %678 = vmatprep.subr.mxu0 0.0
    %679 = vmatpush2.msra.mxu0 0.0
    %680 = vmatprep.mubr.f32.mxu0 0.0
    %v681 = vand.u32 %v527, 4294901760
    %682 = vmatmul.mubr.f32.gmra.mxu0 %v681
    %v683 = vpop.f32.mrf.mxu0
    %v684 = vadd.f32 %v603, %v683
    %v685 = vpop.f32.mrf.mxu0
    %686 = vdwg.mxu0
    %687 = vmatprep.subr.mxu0 0.0
    %688 = vmatpush1.msra.mxu0 0.0
    %689 = vmatprep.subr.mxu0 0.0
    %690 = vmatpush1.msra.mxu0 0.0
    %691 = vmatprep.subr.mxu0 0.0
    %692 = vmatpush1.msra.mxu0 0.0
    %693 = vmatprep.subr.mxu0 0.0
    %694 = vmatpush1.msra.mxu0 0.0
    %695 = vmatprep.subr.mxu0 0.0
    %696 = vmatpush1.msra.mxu0 0.0
    %697 = vmatprep.subr.mxu0 0.0
    %698 = vmatpush1.msra.mxu0 0.0
    %699 = vmatprep.subr.mxu0 0.0
    %700 = vmatpush1.msra.mxu0 0.0
    %701 = vmatprep.subr.mxu0 0.0
    %702 = vmatpush1.msra.mxu0 0.0
    %703 = vmatprep.subr.mxu0 0.0
    %704 = vmatpush1.msra.mxu0 0.0
    %705 = vmatprep.subr.mxu0 0.0
    %706 = vmatpush1.msra.mxu0 0.0
    %707 = vmatprep.subr.mxu0 0.0
    %708 = vmatpush1.msra.mxu0 0.0
    %709 = vmatprep.subr.mxu0 0.0
    %710 = vmatpush1.msra.mxu0 0.0
    %711 = vmatprep.subr.mxu0 0.0
    %712 = vmatpush1.msra.mxu0 0.0
    %713 = vmatprep.subr.mxu0 0.0
    %714 = vmatpush1.msra.mxu0 0.0
    %715 = vmatprep.subr.mxu0 0.0
    %v716 = vand.u32 %v517, 4294901760
    %v717 = vsub.f32 %v517, %v716
    %718 = vmatpush1.msra.mxu0 %v717
    %719 = vmatprep.subr.mxu0 0.0
    %v720 = vand.u32 %v516, 4294901760
    %v721 = vsub.f32 %v516, %v720
    %722 = vmatpush1.msra.mxu0 %v721
    %723 = vmatprep.subr.mxu0 0.0
    %724 = vmatpush2.msra.mxu0 0.0
    %725 = vmatprep.subr.mxu0 0.0
    %726 = vmatpush2.msra.mxu0 0.0
    %727 = vmatprep.subr.mxu0 0.0
    %728 = vmatpush2.msra.mxu0 0.0
    %729 = vmatprep.subr.mxu0 0.0
    %730 = vmatpush2.msra.mxu0 0.0
    %731 = vmatprep.subr.mxu0 0.0
    %732 = vmatpush2.msra.mxu0 0.0
    %733 = vmatprep.subr.mxu0 0.0
    %734 = vmatpush2.msra.mxu0 0.0
    %735 = vmatprep.subr.mxu0 0.0
    %736 = vmatpush2.msra.mxu0 0.0
    %737 = vmatprep.subr.mxu0 0.0
    %738 = vmatpush2.msra.mxu0 0.0
    %739 = vmatprep.subr.mxu0 0.0
    %740 = vmatpush2.msra.mxu0 0.0
    %741 = vmatprep.subr.mxu0 0.0
    %742 = vmatpush2.msra.mxu0 0.0
    %743 = vmatprep.subr.mxu0 0.0
    %744 = vmatpush2.msra.mxu0 0.0
    %745 = vmatprep.subr.mxu0 0.0
    %746 = vmatpush2.msra.mxu0 0.0
    %747 = vmatprep.subr.mxu0 0.0
    %748 = vmatpush2.msra.mxu0 0.0
    %749 = vmatprep.subr.mxu0 0.0
    %750 = vmatpush2.msra.mxu0 0.0
    %751 = vmatprep.subr.mxu0 0.0
    %752 = vmatpush2.msra.mxu0 0.0
    %753 = vmatprep.subr.mxu0 0.0
    %754 = vmatpush2.msra.mxu0 0.0
    %755 = vmatprep.mubr.f32.mxu0 0.0
    %v756 = vand.u32 %v527, 4294901760
    %v757 = vsub.f32 %v527, %v756
    %758 = vmatmul.mubr.f32.gmra.mxu0 %v757
    %v759 = vpop.f32.mrf.mxu0
    %v760 = vadd.f32 %v684, %v759
    %v761 = vpop.f32.mrf.mxu0
    %762 = vdwg.mxu0
    %763 = vmatprep.subr.mxu0 0.0
    %764 = vmatpush1.msra.mxu0 0.0
    %765 = vmatprep.subr.mxu0 0.0
    %766 = vmatpush1.msra.mxu0 0.0
    %767 = vmatprep.subr.mxu0 0.0
    %768 = vmatpush1.msra.mxu0 0.0
    %769 = vmatprep.subr.mxu0 0.0
    %770 = vmatpush1.msra.mxu0 0.0
    %771 = vmatprep.subr.mxu0 0.0
    %772 = vmatpush1.msra.mxu0 0.0
    %773 = vmatprep.subr.mxu0 0.0
    %774 = vmatpush1.msra.mxu0 0.0
    %775 = vmatprep.subr.mxu0 0.0
    %776 = vmatpush1.msra.mxu0 0.0
    %777 = vmatprep.subr.mxu0 0.0
    %778 = vmatpush1.msra.mxu0 0.0
    %779 = vmatprep.subr.mxu0 0.0
    %780 = vmatpush1.msra.mxu0 0.0
    %781 = vmatprep.subr.mxu0 0.0
    %782 = vmatpush1.msra.mxu0 0.0
    %783 = vmatprep.subr.mxu0 0.0
    %784 = vmatpush1.msra.mxu0 0.0
    %785 = vmatprep.subr.mxu0 0.0
    %786 = vmatpush1.msra.mxu0 0.0
    %787 = vmatprep.subr.mxu0 0.0
    %788 = vmatpush1.msra.mxu0 0.0
    %789 = vmatprep.subr.mxu0 0.0
    %790 = vmatpush1.msra.mxu0 0.0
    %791 = vmatprep.subr.mxu0 0.0
    %v792 = vand.u32 %v517, 4294901760
    %793 = vmatpush1.msra.mxu0 %v792
    %794 = vmatprep.subr.mxu0 0.0
    %v795 = vand.u32 %v516, 4294901760
    %796 = vmatpush1.msra.mxu0 %v795
    %797 = vmatprep.subr.mxu0 0.0
    %798 = vmatpush2.msra.mxu0 0.0
    %799 = vmatprep.subr.mxu0 0.0
    %800 = vmatpush2.msra.mxu0 0.0
    %801 = vmatprep.subr.mxu0 0.0
    %802 = vmatpush2.msra.mxu0 0.0
    %803 = vmatprep.subr.mxu0 0.0
    %804 = vmatpush2.msra.mxu0 0.0
    %805 = vmatprep.subr.mxu0 0.0
    %806 = vmatpush2.msra.mxu0 0.0
    %807 = vmatprep.subr.mxu0 0.0
    %808 = vmatpush2.msra.mxu0 0.0
    %809 = vmatprep.subr.mxu0 0.0
    %810 = vmatpush2.msra.mxu0 0.0
    %811 = vmatprep.subr.mxu0 0.0
    %812 = vmatpush2.msra.mxu0 0.0
    %813 = vmatprep.subr.mxu0 0.0
    %814 = vmatpush2.msra.mxu0 0.0
    %815 = vmatprep.subr.mxu0 0.0
    %816 = vmatpush2.msra.mxu0 0.0
    %817 = vmatprep.subr.mxu0 0.0
    %818 = vmatpush2.msra.mxu0 0.0
    %819 = vmatprep.subr.mxu0 0.0
    %820 = vmatpush2.msra.mxu0 0.0
    %821 = vmatprep.subr.mxu0 0.0
    %822 = vmatpush2.msra.mxu0 0.0
    %823 = vmatprep.subr.mxu0 0.0
    %824 = vmatpush2.msra.mxu0 0.0
    %825 = vmatprep.subr.mxu0 0.0
    %826 = vmatpush2.msra.mxu0 0.0
    %827 = vmatprep.subr.mxu0 0.0
    %828 = vmatpush2.msra.mxu0 0.0
    %829 = vmatprep.mubr.f32.mxu0 0.0
    %v830 = vand.u32 %v527, 4294901760
    %v831 = vsub.f32 %v527, %v830
    %v832 = vand.u32 %v831, 4294901760
    %833 = vmatmul.mubr.f32.gmra.mxu0 %v832
    %v834 = vpop.f32.mrf.mxu0
    %v835 = vadd.f32 %v760, %v834
    %v836 = vpop.f32.mrf.mxu0
    %837 = vdwg.mxu0
    %838 = vmatprep.subr.mxu0 0.0
    %839 = vmatpush1.msra.mxu0 0.0
    %840 = vmatprep.subr.mxu0 0.0
    %841 = vmatpush1.msra.mxu0 0.0
    %842 = vmatprep.subr.mxu0 0.0
    %843 = vmatpush1.msra.mxu0 0.0
    %844 = vmatprep.subr.mxu0 0.0
    %845 = vmatpush1.msra.mxu0 0.0
    %846 = vmatprep.subr.mxu0 0.0
    %847 = vmatpush1.msra.mxu0 0.0
    %848 = vmatprep.subr.mxu0 0.0
    %849 = vmatpush1.msra.mxu0 0.0
    %850 = vmatprep.subr.mxu0 0.0
    %851 = vmatpush1.msra.mxu0 0.0
    %852 = vmatprep.subr.mxu0 0.0
    %853 = vmatpush1.msra.mxu0 0.0
    %854 = vmatprep.subr.mxu0 0.0
    %855 = vmatpush1.msra.mxu0 0.0
    %856 = vmatprep.subr.mxu0 0.0
    %857 = vmatpush1.msra.mxu0 0.0
    %858 = vmatprep.subr.mxu0 0.0
    %859 = vmatpush1.msra.mxu0 0.0
    %860 = vmatprep.subr.mxu0 0.0
    %861 = vmatpush1.msra.mxu0 0.0
    %862 = vmatprep.subr.mxu0 0.0
    %863 = vmatpush1.msra.mxu0 0.0
    %864 = vmatprep.subr.mxu0 0.0
    %865 = vmatpush1.msra.mxu0 0.0
    %866 = vmatprep.subr.mxu0 0.0
    %v867 = vand.u32 %v517, 4294901760
    %v868 = vsub.f32 %v517, %v867
    %v869 = vand.u32 %v868, 4294901760
    %870 = vmatpush1.msra.mxu0 %v869
    %871 = vmatprep.subr.mxu0 0.0
    %v872 = vand.u32 %v516, 4294901760
    %v873 = vsub.f32 %v516, %v872
    %v874 = vand.u32 %v873, 4294901760
    %875 = vmatpush1.msra.mxu0 %v874
    %876 = vmatprep.subr.mxu0 0.0
    %877 = vmatpush2.msra.mxu0 0.0
    %878 = vmatprep.subr.mxu0 0.0
    %879 = vmatpush2.msra.mxu0 0.0
    %880 = vmatprep.subr.mxu0 0.0
    %881 = vmatpush2.msra.mxu0 0.0
    %882 = vmatprep.subr.mxu0 0.0
    %883 = vmatpush2.msra.mxu0 0.0
    %884 = vmatprep.subr.mxu0 0.0
    %885 = vmatpush2.msra.mxu0 0.0
    %886 = vmatprep.subr.mxu0 0.0
    %887 = vmatpush2.msra.mxu0 0.0
    %888 = vmatprep.subr.mxu0 0.0
    %889 = vmatpush2.msra.mxu0 0.0
    %890 = vmatprep.subr.mxu0 0.0
    %891 = vmatpush2.msra.mxu0 0.0
    %892 = vmatprep.subr.mxu0 0.0
    %893 = vmatpush2.msra.mxu0 0.0
    %894 = vmatprep.subr.mxu0 0.0
    %895 = vmatpush2.msra.mxu0 0.0
    %896 = vmatprep.subr.mxu0 0.0
    %897 = vmatpush2.msra.mxu0 0.0
    %898 = vmatprep.subr.mxu0 0.0
    %899 = vmatpush2.msra.mxu0 0.0
    %900 = vmatprep.subr.mxu0 0.0
    %901 = vmatpush2.msra.mxu0 0.0
    %902 = vmatprep.subr.mxu0 0.0
    %903 = vmatpush2.msra.mxu0 0.0
    %904 = vmatprep.subr.mxu0 0.0
    %905 = vmatpush2.msra.mxu0 0.0
    %906 = vmatprep.subr.mxu0 0.0
    %907 = vmatpush2.msra.mxu0 0.0
    %908 = vmatprep.mubr.f32.mxu0 0.0
    %v909 = vand.u32 %v527, 4294901760
    %910 = vmatmul.mubr.f32.gmra.mxu0 %v909
    %v911 = vpop.f32.mrf.mxu0
    %v912 = vadd.f32 %v835, %v911
    %v913 = vpop.f32.mrf.mxu0
    %914 = vdwg.mxu0
    %915 = vmatprep.subr.mxu0 0.0
    %916 = vmatpush1.msra.mxu0 0.0
    %917 = vmatprep.subr.mxu0 0.0
    %918 = vmatpush1.msra.mxu0 0.0
    %919 = vmatprep.subr.mxu0 0.0
    %920 = vmatpush1.msra.mxu0 0.0
    %921 = vmatprep.subr.mxu0 0.0
    %922 = vmatpush1.msra.mxu0 0.0
    %923 = vmatprep.subr.mxu0 0.0
    %924 = vmatpush1.msra.mxu0 0.0
    %925 = vmatprep.subr.mxu0 0.0
    %926 = vmatpush1.msra.mxu0 0.0
    %927 = vmatprep.subr.mxu0 0.0
    %928 = vmatpush1.msra.mxu0 0.0
    %929 = vmatprep.subr.mxu0 0.0
    %930 = vmatpush1.msra.mxu0 0.0
    %931 = vmatprep.subr.mxu0 0.0
    %932 = vmatpush1.msra.mxu0 0.0
    %933 = vmatprep.subr.mxu0 0.0
    %934 = vmatpush1.msra.mxu0 0.0
    %935 = vmatprep.subr.mxu0 0.0
    %936 = vmatpush1.msra.mxu0 0.0
    %937 = vmatprep.subr.mxu0 0.0
    %938 = vmatpush1.msra.mxu0 0.0
    %939 = vmatprep.subr.mxu0 0.0
    %940 = vmatpush1.msra.mxu0 0.0
    %941 = vmatprep.subr.mxu0 0.0
    %942 = vmatpush1.msra.mxu0 0.0
    %943 = vmatprep.subr.mxu0 0.0
    %v944 = vand.u32 %v517, 4294901760
    %945 = vmatpush1.msra.mxu0 %v944
    %946 = vmatprep.subr.mxu0 0.0
    %v947 = vand.u32 %v516, 4294901760
    %948 = vmatpush1.msra.mxu0 %v947
    %949 = vmatprep.subr.mxu0 0.0
    %950 = vmatpush2.msra.mxu0 0.0
    %951 = vmatprep.subr.mxu0 0.0
    %952 = vmatpush2.msra.mxu0 0.0
    %953 = vmatprep.subr.mxu0 0.0
    %954 = vmatpush2.msra.mxu0 0.0
    %955 = vmatprep.subr.mxu0 0.0
    %956 = vmatpush2.msra.mxu0 0.0
    %957 = vmatprep.subr.mxu0 0.0
    %958 = vmatpush2.msra.mxu0 0.0
    %959 = vmatprep.subr.mxu0 0.0
    %960 = vmatpush2.msra.mxu0 0.0
    %961 = vmatprep.subr.mxu0 0.0
    %962 = vmatpush2.msra.mxu0 0.0
    %963 = vmatprep.subr.mxu0 0.0
    %964 = vmatpush2.msra.mxu0 0.0
    %965 = vmatprep.subr.mxu0 0.0
    %966 = vmatpush2.msra.mxu0 0.0
    %967 = vmatprep.subr.mxu0 0.0
    %968 = vmatpush2.msra.mxu0 0.0
    %969 = vmatprep.subr.mxu0 0.0
    %970 = vmatpush2.msra.mxu0 0.0
    %971 = vmatprep.subr.mxu0 0.0
    %972 = vmatpush2.msra.mxu0 0.0
    %973 = vmatprep.subr.mxu0 0.0
    %974 = vmatpush2.msra.mxu0 0.0
    %975 = vmatprep.subr.mxu0 0.0
    %976 = vmatpush2.msra.mxu0 0.0
    %977 = vmatprep.subr.mxu0 0.0
    %978 = vmatpush2.msra.mxu0 0.0
    %979 = vmatprep.subr.mxu0 0.0
    %980 = vmatpush2.msra.mxu0 0.0
    %981 = vmatprep.mubr.f32.mxu0 0.0
    %v982 = vand.u32 %v527, 4294901760
    %983 = vmatmul.mubr.f32.gmra.mxu0 %v982
    %v984 = vpop.f32.mrf.mxu0
    %v985 = vadd.f32 %v912, %v984
    %v986 = vpop.f32.mrf.mxu0
    %987 = vdwg.mxu0
    %988 = vst [vmem:[#allocation2] sm:$0x3] %v985
    // Predicated region
    $region22: #{_lambda_.1} parent=1 // pred_check
      _
    $region23: #{_lambda_.1} parent=1 // pred_check_branch
      %990 = sbr.rel (0) target = $region25
    $region24: #{_lambda_.1} parent=1 // pred_region
      %s992 = ssub.s32 32, 32
      %993 = vsyncadd [#allocation3], %s992
      %s995 = sshll.u32 [#allocation2], 4
      %s996 = int_to_ptr.vmem [resolvable:$true] %s995
      %998 = dma.vmem_to_hbm [thread:$0]  %s996, 32, %s5, [#allocation3]
    $region25: #{_lambda_.1} parent=1 // pred_fallthru
      _
    // Predicated region
    $region26: #{_lambda_.1} parent=1 // pred_check
      _
    $region27: #{_lambda_.1} parent=1 // pred_check_branch
      %1000 = sbr.rel (0) target = $region29
    $region28: #{_lambda_.1} parent=1 // pred_region
      %1001 = dma.done [#allocation3], 32
    $region29: #{_lambda_.1} parent=1 // pred_fallthru
      _
    %1002 = vsyncpa [#allocation3], 1

</llo_original>
